<compile_context>
chip_gen: v5e
topology: v5e:2x2
jax: 0.10.0
libtpu: 0.0.40
codegen_flags: <defaults>
</compile_context>

<pallas_src>
import functools
from typing import NamedTuple

import jax
import jax.numpy as jnp
from jax.experimental import pallas as pl
from jax.experimental.pallas import tpu as pltpu


def _align8(n: int) -> int:
    return ((n + 7) // 8) * 8


class ModelDims(NamedTuple):
    Cout: int
    K: int
    pad: int
    L: int        # conv output length == LSTM input size
    H: int
    O: int
    r_conv: int
    r_wih: int
    r_whh: int
    r_bl: int
    r_wlin: int
    r_blin: int
    rows: int
    width: int


# ---------------------------------------------------------------------------
# One-time (model-load) BN fold + packing of every weight into a single blob.
# ---------------------------------------------------------------------------
def pack_model(params, pad, stride=1, eps=1e-5):
    w_conv = params["w_conv"]
    Cout, Cin, K = w_conv.shape
    assert Cin == 1, "model forward unsqueezes to a single input channel"
    assert stride == 1, "TODO(synk): general conv stride not implemented"
    H = params["w_hh"].shape[1]
    G = 4 * H
    O = params["w_lin"].shape[0]
    L = params["w_ih"].shape[1]
    assert params["w_lin"].shape[1] == H
    width = max(128, G)
    assert K + 1 <= width and O <= width

    # row layout -- every section starts on an 8-row (sublane-group) boundary
    r_conv = 0
    r_wih = r_conv + _align8(Cout)
    r_whh = r_wih + _align8(L)
    r_bl = r_whh + _align8(H)
    r_wlin = r_bl + 8
    r_blin = r_wlin + _align8(H)
    rows = r_blin + 8

    # fold BatchNorm (eval mode) into the conv weight/bias (exact for inference)
    scale = params["gamma"] * jax.lax.rsqrt(params["var"] + eps)            # (Cout,)
    w_fold = w_conv[:, 0, :] * scale[:, None]                               # (Cout, K)
    b_fold = (params["b_conv"] - params["mu"]) * scale + params["beta"]     # (Cout,)

    blob = jnp.zeros((rows, width), jnp.float32)
    blob = blob.at[r_conv:r_conv + Cout, 0:K].set(w_fold)
    blob = blob.at[r_conv:r_conv + Cout, K].set(b_fold)
    blob = blob.at[r_wih:r_wih + L, 0:G].set(params["w_ih"].T)
    blob = blob.at[r_whh:r_whh + H, 0:G].set(params["w_hh"].T)
    blob = blob.at[r_bl, 0:G].set(params["b_ih"] + params["b_hh"])
    blob = blob.at[r_wlin:r_wlin + H, 0:O].set(params["w_lin"].T)
    blob = blob.at[r_blin, 0:O].set(params["b_lin"])

    dims = ModelDims(Cout, K, pad, L, H, O,
                     r_conv, r_wih, r_whh, r_bl, r_wlin, r_blin, rows, width)
    return jax.device_put(blob), dims


# ---------------------------------------------------------------------------
# Fused kernel: Conv1d(+folded BN)+ReLU  ->  LSTM  ->  Linear
# Single invocation (empty grid); both operands are full-array VMEM blocks.
# ---------------------------------------------------------------------------
def model_kernel(x_ref, wb_ref, out_ref, xp_scr, *, d: ModelDims, B, L_in):
    K, pad, L, H, O, Cout = d.K, d.pad, d.L, d.H, d.O, d.Cout
    G = 4 * H

    # ---- build padded input in VMEM (replaces wrapper-side jnp.pad) ----------
    xp_scr[...] = jnp.zeros_like(xp_scr)
    xp_scr[:, pad:pad + L_in] = x_ref[...]
    xp = xp_scr[...]                                       # (B, L + K - 1)
    xs = [xp[:, k:k + L] for k in range(K)]                # shared tap slices, (B, L)

    # ---- static weight sections (all 8-row aligned in the blob) ---------------
    cw = wb_ref[d.r_conv:d.r_conv + Cout, :]               # (Cout, W): taps 0..K-1, bias col K
    wih = wb_ref[d.r_wih:d.r_wih + L, 0:G]                 # (L, 4H)
    whh = wb_ref[d.r_whh:d.r_whh + H, 0:G]                 # (H, 4H)
    blstm = wb_ref[d.r_bl:d.r_bl + 1, 0:G]                 # (1, 4H)
    wlin = wb_ref[d.r_wlin:d.r_wlin + H, 0:O]              # (H, O)
    blin = wb_ref[d.r_blin:d.r_blin + 1, 0:O]              # (1, O)

    # ---- Conv1d(+folded BN)+ReLU and hoisted LSTM input projection ------------
    # Per output channel: pure-VPU conv (Cin == 1), then one (B,L)@(L,4H) matmul.
    # Keeping per-timestep gate pre-activations as separate (B,4H) arrays avoids
    # any unaligned sublane slicing inside the serial recurrence.
    xgates = []
    for o in range(Cout):                                  # static, Cout == seq_len
        acc = cw[o:o + 1, K:K + 1]                         # folded bias, broadcasts
        for k in range(K):
            acc = acc + cw[o:o + 1, k:k + 1] * xs[k]
        feat = jnp.maximum(acc, 0.0)                       # (B, L)
        xgates.append(
            jnp.dot(feat, wih, preferred_element_type=jnp.float32) + blstm)

    # ---- LSTM recurrence (gate order [i, f, g, o]) -----------------------------
    lane = jax.lax.broadcasted_iota(jnp.int32, (B, G), 1)
    is_g = (lane >= 2 * H) & (lane < 3 * H)

    h = None
    c = None
    for t in range(Cout):                                  # static, short sequence
        g_t = xgates[t]
        if h is not None:                                  # skip h@W_hh at t=0 (h == 0)
            g_t = g_t + jnp.dot(h, whh, preferred_element_type=jnp.float32)
        # single-tanh gate activation: sigmoid(x) = 0.5 * tanh(x / 2) + 0.5
        z = jnp.where(is_g, g_t, 0.5 * g_t)
        y = jnp.tanh(z)
        act = jnp.where(is_g, y, 0.5 * y + 0.5)            # tanh on g lanes, sigmoid elsewhere
        i_g = act[:, 0 * H:1 * H]
        f_g = act[:, 1 * H:2 * H]
        g_g = act[:, 2 * H:3 * H]
        o_g = act[:, 3 * H:4 * H]
        c = i_g * g_g if c is None else f_g * c + i_g * g_g
        h = o_g * jnp.tanh(c)

    # ---- Linear head on the last hidden state -----------------------------------
    out_ref[...] = jnp.dot(h, wlin, preferred_element_type=jnp.float32) + blin


# ---------------------------------------------------------------------------
# Per-call forward: only (x, blob) -> one Pallas call, no per-call packing ops.
# ---------------------------------------------------------------------------
@functools.partial(jax.jit, static_argnames=("dims",))
def deep_learning_model(x, blob, dims: ModelDims):
    B, L_in = x.shape
    assert L_in + 2 * dims.pad - dims.K + 1 == dims.L, \
        "LSTM input_size must equal the conv output length"
    kernel = functools.partial(model_kernel, d=dims, B=B, L_in=L_in)
    return pl.pallas_call(
        kernel,
        out_shape=jax.ShapeDtypeStruct((B, dims.O), jnp.float32),
        in_specs=[pl.BlockSpec(memory_space=pltpu.MemorySpace.VMEM)] * 2,
        out_specs=pl.BlockSpec(memory_space=pltpu.MemorySpace.VMEM),
        scratch_shapes=[pltpu.VMEM((B, L_in + 2 * dims.pad), jnp.float32)],
    )(x, blob)


# ---------------------------------------------------------------------------
# Pure-JAX reference of the original (unfused) math, for a sanity check.
# ---------------------------------------------------------------------------
def reference(x, params, pad):
    w_conv, b_conv = params["w_conv"], params["b_conv"]
    gamma, beta, mu, var = params["gamma"], params["beta"], params["mu"], params["var"]
    w_ih, w_hh, b_ih, b_hh = params["w_ih"], params["w_hh"], params["b_ih"], params["b_hh"]
    w_lin, b_lin = params["w_lin"], params["b_lin"]

    xp = jnp.pad(x[:, None, :], ((0, 0), (0, 0), (pad, pad)))
    B, Cin, Lp = xp.shape
    Cout, _, K = w_conv.shape
    L = Lp - (K - 1)
    conv = jnp.zeros((B, Cout, L), jnp.float32)
    for k in range(K):
        conv = conv + jnp.einsum("oc,bcl->bol", w_conv[:, :, k], xp[:, :, k:k + L])
    conv = conv + b_conv[None, :, None]
    conv = (conv - mu[None, :, None]) / jnp.sqrt(var[None, :, None] + 1e-5)
    conv = conv * gamma[None, :, None] + beta[None, :, None]
    conv = jnp.maximum(conv, 0.0)

    H = w_hh.shape[1]
    h = jnp.zeros((B, H), jnp.float32)
    c = jnp.zeros((B, H), jnp.float32)
    for t in range(Cout):
        g = conv[:, t, :] @ w_ih.T + h @ w_hh.T + b_ih + b_hh
        i_g = jax.nn.sigmoid(g[:, :H])
        f_g = jax.nn.sigmoid(g[:, H:2 * H])
        g_g = jnp.tanh(g[:, 2 * H:3 * H])
        o_g = jax.nn.sigmoid(g[:, 3 * H:])
        c = f_g * c + i_g * g_g
        h = o_g * jnp.tanh(c)
    return h @ w_lin.T + b_lin


if __name__ == "__main__":
    # ---- synthetic config (mirrors _readConfig output) ----
    config = {
        "Conv1d": [[1, 4, 3, 1, 1]],   # in=1, out=4, k=3, stride=1, pad=1
        "LSTM":   [[16, 32]],          # input_size=16, hidden=32
        "Linear": [[32, 8]],           # 32 -> 8
    }
    cin, cout, ksz, stride, pad = config["Conv1d"][0]
    in_sz, hid = config["LSTM"][0]
    lin_in, lin_out = config["Linear"][0]

    B, L = 2, 16
    assert in_sz == L and lin_in == hid

    key = jax.random.PRNGKey(0)
    ks = jax.random.split(key, 13)
    u = lambda k, shape, lo, hi: jax.random.uniform(k, shape, jnp.float32, lo, hi)
    s_conv = (cin * ksz) ** -0.5
    s_lstm = hid ** -0.5
    s_lin = lin_in ** -0.5

    params = {
        # Conv1d(1, 4, 3)
        "w_conv": u(ks[0], (cout, cin, ksz), -s_conv, s_conv),
        "b_conv": u(ks[1], (cout,), -s_conv, s_conv),
        # BatchNorm1d(4) -- eval mode, non-trivial running stats to exercise the fold
        "gamma": u(ks[2], (cout,), 0.5, 1.5),
        "beta": u(ks[3], (cout,), -0.5, 0.5),
        "mu": u(ks[4], (cout,), -0.5, 0.5),
        "var": u(ks[5], (cout,), 0.5, 1.5),
        # LSTM(16, 32), gate order [i, f, g, o]
        "w_ih": u(ks[6], (4 * hid, in_sz), -s_lstm, s_lstm),
        "w_hh": u(ks[7], (4 * hid, hid), -s_lstm, s_lstm),
        "b_ih": u(ks[8], (4 * hid,), -s_lstm, s_lstm),
        "b_hh": u(ks[9], (4 * hid,), -s_lstm, s_lstm),
        # Linear(32, 8)
        "w_lin": u(ks[10], (lin_out, lin_in), -s_lin, s_lin),
        "b_lin": u(ks[11], (lin_out,), -s_lin, s_lin),
    }

    x = jax.random.normal(ks[12], (B, L), jnp.float32)

    # one-time model load: BN fold + weight packing (NOT in the per-call path)
    blob, dims = pack_model(params, pad, stride)

    out = deep_learning_model(x, blob, dims)
    out = jax.block_until_ready(out)

    ref = reference(x, params, pad)
    assert out.shape == (B, lin_out), out.shape
    assert jnp.allclose(out, ref, rtol=1e-4, atol=1e-5), (out, ref)

    print("KERNEL_OK")
</pallas_src>

<mosaic_0001>
module attributes {stable_mosaic.version = 11 : i64} {
  func.func @model_kernel(%arg0: memref<2x16xf32, #tpu.memory_space<vmem>>, %arg1: memref<104x128xf32, #tpu.memory_space<vmem>>, %arg2: memref<2x8xf32, #tpu.memory_space<vmem>>, %arg3: memref<2x18xf32, #tpu.memory_space<vmem>>) attributes {dimension_semantics = [], scalar_prefetch = 0 : i64, scratch_operands = 1 : i64, tpu.core_type = #tpu.core_type<tc>} {
    %cst = arith.constant 0.000000e+00 : f32
    %0 = vector.broadcast %cst : f32 to vector<2x18xf32>
    %c0 = arith.constant 0 : index
    %c0_0 = arith.constant 0 : index
    %1 = vector.load %arg3[%c0, %c0_0] : memref<2x18xf32, #tpu.memory_space<vmem>>, vector<2x18xf32>
    tpu.vector_store %arg3[%c0, %c0_0], %0 {strides = array<i32>} : memref<2x18xf32, #tpu.memory_space<vmem>>, vector<2x18xf32>,
    %c0_1 = arith.constant 0 : index
    %c0_2 = arith.constant 0 : index
    %2 = vector.load %arg0[%c0_1, %c0_2] : memref<2x16xf32, #tpu.memory_space<vmem>>, vector<2x16xf32>
    %c0_3 = arith.constant 0 : index
    %c1 = arith.constant 1 : index
    %3 = vector.load %arg3[%c0_3, %c1] : memref<2x18xf32, #tpu.memory_space<vmem>>, vector<2x16xf32>
    tpu.vector_store %arg3[%c0_3, %c1], %2 {strides = array<i32>} : memref<2x18xf32, #tpu.memory_space<vmem>>, vector<2x16xf32>,
    %c0_4 = arith.constant 0 : index
    %c0_5 = arith.constant 0 : index
    %4 = vector.load %arg3[%c0_4, %c0_5] : memref<2x18xf32, #tpu.memory_space<vmem>>, vector<2x18xf32>
    %5 = vector.extract_strided_slice %4 {offsets = [0, 0], sizes = [2, 16], strides = [1, 1]} : vector<2x18xf32> to vector<2x16xf32>
    %6 = vector.extract_strided_slice %4 {offsets = [0, 1], sizes = [2, 16], strides = [1, 1]} : vector<2x18xf32> to vector<2x16xf32>
    %7 = vector.extract_strided_slice %4 {offsets = [0, 2], sizes = [2, 16], strides = [1, 1]} : vector<2x18xf32> to vector<2x16xf32>
    %c0_6 = arith.constant 0 : index
    %c0_7 = arith.constant 0 : index
    %8 = vector.load %arg1[%c0_6, %c0_7] : memref<104x128xf32, #tpu.memory_space<vmem>>, vector<4x128xf32>
    %c8 = arith.constant 8 : index
    %c0_8 = arith.constant 0 : index
    %9 = vector.load %arg1[%c8, %c0_8] : memref<104x128xf32, #tpu.memory_space<vmem>>, vector<16x128xf32>
    %c24 = arith.constant 24 : index
    %c0_9 = arith.constant 0 : index
    %10 = vector.load %arg1[%c24, %c0_9] : memref<104x128xf32, #tpu.memory_space<vmem>>, vector<32x128xf32>
    %c56 = arith.constant 56 : index
    %c0_10 = arith.constant 0 : index
    %11 = vector.load %arg1[%c56, %c0_10] : memref<104x128xf32, #tpu.memory_space<vmem>>, vector<1x128xf32>
    %c64 = arith.constant 64 : index
    %c0_11 = arith.constant 0 : index
    %12 = vector.load %arg1[%c64, %c0_11] : memref<104x128xf32, #tpu.memory_space<vmem>>, vector<32x8xf32>
    %c96 = arith.constant 96 : index
    %c0_12 = arith.constant 0 : index
    %13 = vector.load %arg1[%c96, %c0_12] : memref<104x128xf32, #tpu.memory_space<vmem>>, vector<1x8xf32>
    %14 = vector.extract_strided_slice %8 {offsets = [0, 3], sizes = [1, 1], strides = [1, 1]} : vector<4x128xf32> to vector<1x1xf32>
    %15 = vector.extract_strided_slice %8 {offsets = [0, 0], sizes = [1, 1], strides = [1, 1]} : vector<4x128xf32> to vector<1x1xf32>
    %16 = vector.broadcast %15 : vector<1x1xf32> to vector<2x16xf32>
    %17 = arith.mulf %16, %5 : vector<2x16xf32>
    %18 = vector.broadcast %14 : vector<1x1xf32> to vector<2x16xf32>
    %19 = arith.addf %18, %17 : vector<2x16xf32>
    %20 = vector.extract_strided_slice %8 {offsets = [0, 1], sizes = [1, 1], strides = [1, 1]} : vector<4x128xf32> to vector<1x1xf32>
    %21 = vector.broadcast %20 : vector<1x1xf32> to vector<2x16xf32>
    %22 = arith.mulf %21, %6 : vector<2x16xf32>
    %23 = arith.addf %19, %22 : vector<2x16xf32>
    %24 = vector.extract_strided_slice %8 {offsets = [0, 2], sizes = [1, 1], strides = [1, 1]} : vector<4x128xf32> to vector<1x1xf32>
    %25 = vector.broadcast %24 : vector<1x1xf32> to vector<2x16xf32>
    %26 = arith.mulf %25, %7 : vector<2x16xf32>
    %27 = arith.addf %23, %26 : vector<2x16xf32>
    %cst_13 = arith.constant 0.000000e+00 : f32
    %28 = vector.broadcast %cst_13 : f32 to vector<2x16xf32>
    %29 = arith.maximumf %27, %28 : vector<2x16xf32>
    %cst_14 = arith.constant dense<0.000000e+00> : vector<2x128xf32>
    %30 = tpu.matmul %29, %9, %cst_14 {dimension_numbers = #tpu.dot_dimension_numbers<[1], [0], [0], [1], [0, 0, 1, 1], [], []>} : vector<2x16xf32>, vector<16x128xf32>, vector<2x128xf32> -> vector<2x128xf32>
    %31 = vector.broadcast %11 : vector<1x128xf32> to vector<2x128xf32>
    %32 = arith.addf %30, %31 : vector<2x128xf32>
    %33 = vector.extract_strided_slice %8 {offsets = [1, 3], sizes = [1, 1], strides = [1, 1]} : vector<4x128xf32> to vector<1x1xf32>
    %34 = vector.extract_strided_slice %8 {offsets = [1, 0], sizes = [1, 1], strides = [1, 1]} : vector<4x128xf32> to vector<1x1xf32>
    %35 = vector.broadcast %34 : vector<1x1xf32> to vector<2x16xf32>
    %36 = arith.mulf %35, %5 : vector<2x16xf32>
    %37 = vector.broadcast %33 : vector<1x1xf32> to vector<2x16xf32>
    %38 = arith.addf %37, %36 : vector<2x16xf32>
    %39 = vector.extract_strided_slice %8 {offsets = [1, 1], sizes = [1, 1], strides = [1, 1]} : vector<4x128xf32> to vector<1x1xf32>
    %40 = vector.broadcast %39 : vector<1x1xf32> to vector<2x16xf32>
    %41 = arith.mulf %40, %6 : vector<2x16xf32>
    %42 = arith.addf %38, %41 : vector<2x16xf32>
    %43 = vector.extract_strided_slice %8 {offsets = [1, 2], sizes = [1, 1], strides = [1, 1]} : vector<4x128xf32> to vector<1x1xf32>
    %44 = vector.broadcast %43 : vector<1x1xf32> to vector<2x16xf32>
    %45 = arith.mulf %44, %7 : vector<2x16xf32>
    %46 = arith.addf %42, %45 : vector<2x16xf32>
    %cst_15 = arith.constant 0.000000e+00 : f32
    %47 = vector.broadcast %cst_15 : f32 to vector<2x16xf32>
    %48 = arith.maximumf %46, %47 : vector<2x16xf32>
    %cst_16 = arith.constant dense<0.000000e+00> : vector<2x128xf32>
    %49 = tpu.matmul %48, %9, %cst_16 {dimension_numbers = #tpu.dot_dimension_numbers<[1], [0], [0], [1], [0, 0, 1, 1], [], []>} : vector<2x16xf32>, vector<16x128xf32>, vector<2x128xf32> -> vector<2x128xf32>
    %50 = vector.broadcast %11 : vector<1x128xf32> to vector<2x128xf32>
    %51 = arith.addf %49, %50 : vector<2x128xf32>
    %52 = vector.extract_strided_slice %8 {offsets = [2, 3], sizes = [1, 1], strides = [1, 1]} : vector<4x128xf32> to vector<1x1xf32>
    %53 = vector.extract_strided_slice %8 {offsets = [2, 0], sizes = [1, 1], strides = [1, 1]} : vector<4x128xf32> to vector<1x1xf32>
    %54 = vector.broadcast %53 : vector<1x1xf32> to vector<2x16xf32>
    %55 = arith.mulf %54, %5 : vector<2x16xf32>
    %56 = vector.broadcast %52 : vector<1x1xf32> to vector<2x16xf32>
    %57 = arith.addf %56, %55 : vector<2x16xf32>
    %58 = vector.extract_strided_slice %8 {offsets = [2, 1], sizes = [1, 1], strides = [1, 1]} : vector<4x128xf32> to vector<1x1xf32>
    %59 = vector.broadcast %58 : vector<1x1xf32> to vector<2x16xf32>
    %60 = arith.mulf %59, %6 : vector<2x16xf32>
    %61 = arith.addf %57, %60 : vector<2x16xf32>
    %62 = vector.extract_strided_slice %8 {offsets = [2, 2], sizes = [1, 1], strides = [1, 1]} : vector<4x128xf32> to vector<1x1xf32>
    %63 = vector.broadcast %62 : vector<1x1xf32> to vector<2x16xf32>
    %64 = arith.mulf %63, %7 : vector<2x16xf32>
    %65 = arith.addf %61, %64 : vector<2x16xf32>
    %cst_17 = arith.constant 0.000000e+00 : f32
    %66 = vector.broadcast %cst_17 : f32 to vector<2x16xf32>
    %67 = arith.maximumf %65, %66 : vector<2x16xf32>
    %cst_18 = arith.constant dense<0.000000e+00> : vector<2x128xf32>
    %68 = tpu.matmul %67, %9, %cst_18 {dimension_numbers = #tpu.dot_dimension_numbers<[1], [0], [0], [1], [0, 0, 1, 1], [], []>} : vector<2x16xf32>, vector<16x128xf32>, vector<2x128xf32> -> vector<2x128xf32>
    %69 = vector.broadcast %11 : vector<1x128xf32> to vector<2x128xf32>
    %70 = arith.addf %68, %69 : vector<2x128xf32>
    %71 = vector.extract_strided_slice %8 {offsets = [3, 3], sizes = [1, 1], strides = [1, 1]} : vector<4x128xf32> to vector<1x1xf32>
    %72 = vector.extract_strided_slice %8 {offsets = [3, 0], sizes = [1, 1], strides = [1, 1]} : vector<4x128xf32> to vector<1x1xf32>
    %73 = vector.broadcast %72 : vector<1x1xf32> to vector<2x16xf32>
    %74 = arith.mulf %73, %5 : vector<2x16xf32>
    %75 = vector.broadcast %71 : vector<1x1xf32> to vector<2x16xf32>
    %76 = arith.addf %75, %74 : vector<2x16xf32>
    %77 = vector.extract_strided_slice %8 {offsets = [3, 1], sizes = [1, 1], strides = [1, 1]} : vector<4x128xf32> to vector<1x1xf32>
    %78 = vector.broadcast %77 : vector<1x1xf32> to vector<2x16xf32>
    %79 = arith.mulf %78, %6 : vector<2x16xf32>
    %80 = arith.addf %76, %79 : vector<2x16xf32>
    %81 = vector.extract_strided_slice %8 {offsets = [3, 2], sizes = [1, 1], strides = [1, 1]} : vector<4x128xf32> to vector<1x1xf32>
    %82 = vector.broadcast %81 : vector<1x1xf32> to vector<2x16xf32>
    %83 = arith.mulf %82, %7 : vector<2x16xf32>
    %84 = arith.addf %80, %83 : vector<2x16xf32>
    %cst_19 = arith.constant 0.000000e+00 : f32
    %85 = vector.broadcast %cst_19 : f32 to vector<2x16xf32>
    %86 = arith.maximumf %84, %85 : vector<2x16xf32>
    %cst_20 = arith.constant dense<0.000000e+00> : vector<2x128xf32>
    %87 = tpu.matmul %86, %9, %cst_20 {dimension_numbers = #tpu.dot_dimension_numbers<[1], [0], [0], [1], [0, 0, 1, 1], [], []>} : vector<2x16xf32>, vector<16x128xf32>, vector<2x128xf32> -> vector<2x128xf32>
    %88 = vector.broadcast %11 : vector<1x128xf32> to vector<2x128xf32>
    %89 = arith.addf %87, %88 : vector<2x128xf32>
    %90 = tpu.iota {dimensions = array<i32: 1>} : vector<2x128xi32>
    %c64_i32 = arith.constant 64 : i32
    %91 = vector.broadcast %c64_i32 : i32 to vector<2x128xi32>
    %92 = arith.cmpi sge, %90, %91 : vector<2x128xi32>
    %c96_i32 = arith.constant 96 : i32
    %93 = vector.broadcast %c96_i32 : i32 to vector<2x128xi32>
    %94 = arith.cmpi slt, %90, %93 : vector<2x128xi32>
    %95 = arith.andi %92, %94 : vector<2x128xi1>
    %cst_21 = arith.constant 5.000000e-01 : f32
    %96 = vector.broadcast %cst_21 : f32 to vector<2x128xf32>
    %97 = arith.mulf %96, %32 : vector<2x128xf32>
    %98 = arith.select %95, %32, %97 : vector<2x128xi1>, vector<2x128xf32>
    %99 = math.tanh %98 : vector<2x128xf32>
    %cst_22 = arith.constant 5.000000e-01 : f32
    %100 = vector.broadcast %cst_22 : f32 to vector<2x128xf32>
    %101 = arith.mulf %100, %99 : vector<2x128xf32>
    %cst_23 = arith.constant 5.000000e-01 : f32
    %102 = vector.broadcast %cst_23 : f32 to vector<2x128xf32>
    %103 = arith.addf %101, %102 : vector<2x128xf32>
    %104 = arith.select %95, %99, %103 : vector<2x128xi1>, vector<2x128xf32>
    %105 = vector.extract_strided_slice %104 {offsets = [0, 0], sizes = [2, 32], strides = [1, 1]} : vector<2x128xf32> to vector<2x32xf32>
    %106 = vector.extract_strided_slice %104 {offsets = [0, 64], sizes = [2, 32], strides = [1, 1]} : vector<2x128xf32> to vector<2x32xf32>
    %107 = vector.extract_strided_slice %104 {offsets = [0, 96], sizes = [2, 32], strides = [1, 1]} : vector<2x128xf32> to vector<2x32xf32>
    %108 = arith.mulf %105, %106 : vector<2x32xf32>
    %109 = math.tanh %108 : vector<2x32xf32>
    %110 = arith.mulf %107, %109 : vector<2x32xf32>
    %cst_24 = arith.constant dense<0.000000e+00> : vector<2x128xf32>
    %111 = tpu.matmul %110, %10, %cst_24 {dimension_numbers = #tpu.dot_dimension_numbers<[1], [0], [0], [1], [0, 0, 1, 1], [], []>} : vector<2x32xf32>, vector<32x128xf32>, vector<2x128xf32> -> vector<2x128xf32>
    %112 = arith.addf %51, %111 : vector<2x128xf32>
    %cst_25 = arith.constant 5.000000e-01 : f32
    %113 = vector.broadcast %cst_25 : f32 to vector<2x128xf32>
    %114 = arith.mulf %113, %112 : vector<2x128xf32>
    %115 = arith.select %95, %112, %114 : vector<2x128xi1>, vector<2x128xf32>
    %116 = math.tanh %115 : vector<2x128xf32>
    %cst_26 = arith.constant 5.000000e-01 : f32
    %117 = vector.broadcast %cst_26 : f32 to vector<2x128xf32>
    %118 = arith.mulf %117, %116 : vector<2x128xf32>
    %cst_27 = arith.constant 5.000000e-01 : f32
    %119 = vector.broadcast %cst_27 : f32 to vector<2x128xf32>
    %120 = arith.addf %118, %119 : vector<2x128xf32>
    %121 = arith.select %95, %116, %120 : vector<2x128xi1>, vector<2x128xf32>
    %122 = vector.extract_strided_slice %121 {offsets = [0, 0], sizes = [2, 32], strides = [1, 1]} : vector<2x128xf32> to vector<2x32xf32>
    %123 = vector.extract_strided_slice %121 {offsets = [0, 32], sizes = [2, 32], strides = [1, 1]} : vector<2x128xf32> to vector<2x32xf32>
    %124 = vector.extract_strided_slice %121 {offsets = [0, 64], sizes = [2, 32], strides = [1, 1]} : vector<2x128xf32> to vector<2x32xf32>
    %125 = vector.extract_strided_slice %121 {offsets = [0, 96], sizes = [2, 32], strides = [1, 1]} : vector<2x128xf32> to vector<2x32xf32>
    %126 = arith.mulf %123, %108 : vector<2x32xf32>
    %127 = arith.mulf %122, %124 : vector<2x32xf32>
    %128 = arith.addf %126, %127 : vector<2x32xf32>
    %129 = math.tanh %128 : vector<2x32xf32>
    %130 = arith.mulf %125, %129 : vector<2x32xf32>
    %cst_28 = arith.constant dense<0.000000e+00> : vector<2x128xf32>
    %131 = tpu.matmul %130, %10, %cst_28 {dimension_numbers = #tpu.dot_dimension_numbers<[1], [0], [0], [1], [0, 0, 1, 1], [], []>} : vector<2x32xf32>, vector<32x128xf32>, vector<2x128xf32> -> vector<2x128xf32>
    %132 = arith.addf %70, %131 : vector<2x128xf32>
    %cst_29 = arith.constant 5.000000e-01 : f32
    %133 = vector.broadcast %cst_29 : f32 to vector<2x128xf32>
    %134 = arith.mulf %133, %132 : vector<2x128xf32>
    %135 = arith.select %95, %132, %134 : vector<2x128xi1>, vector<2x128xf32>
    %136 = math.tanh %135 : vector<2x128xf32>
    %cst_30 = arith.constant 5.000000e-01 : f32
    %137 = vector.broadcast %cst_30 : f32 to vector<2x128xf32>
    %138 = arith.mulf %137, %136 : vector<2x128xf32>
    %cst_31 = arith.constant 5.000000e-01 : f32
    %139 = vector.broadcast %cst_31 : f32 to vector<2x128xf32>
    %140 = arith.addf %138, %139 : vector<2x128xf32>
    %141 = arith.select %95, %136, %140 : vector<2x128xi1>, vector<2x128xf32>
    %142 = vector.extract_strided_slice %141 {offsets = [0, 0], sizes = [2, 32], strides = [1, 1]} : vector<2x128xf32> to vector<2x32xf32>
    %143 = vector.extract_strided_slice %141 {offsets = [0, 32], sizes = [2, 32], strides = [1, 1]} : vector<2x128xf32> to vector<2x32xf32>
    %144 = vector.extract_strided_slice %141 {offsets = [0, 64], sizes = [2, 32], strides = [1, 1]} : vector<2x128xf32> to vector<2x32xf32>
    %145 = vector.extract_strided_slice %141 {offsets = [0, 96], sizes = [2, 32], strides = [1, 1]} : vector<2x128xf32> to vector<2x32xf32>
    %146 = arith.mulf %143, %128 : vector<2x32xf32>
    %147 = arith.mulf %142, %144 : vector<2x32xf32>
    %148 = arith.addf %146, %147 : vector<2x32xf32>
    %149 = math.tanh %148 : vector<2x32xf32>
    %150 = arith.mulf %145, %149 : vector<2x32xf32>
    %cst_32 = arith.constant dense<0.000000e+00> : vector<2x128xf32>
    %151 = tpu.matmul %150, %10, %cst_32 {dimension_numbers = #tpu.dot_dimension_numbers<[1], [0], [0], [1], [0, 0, 1, 1], [], []>} : vector<2x32xf32>, vector<32x128xf32>, vector<2x128xf32> -> vector<2x128xf32>
    %152 = arith.addf %89, %151 : vector<2x128xf32>
    %cst_33 = arith.constant 5.000000e-01 : f32
    %153 = vector.broadcast %cst_33 : f32 to vector<2x128xf32>
    %154 = arith.mulf %153, %152 : vector<2x128xf32>
    %155 = arith.select %95, %152, %154 : vector<2x128xi1>, vector<2x128xf32>
    %156 = math.tanh %155 : vector<2x128xf32>
    %cst_34 = arith.constant 5.000000e-01 : f32
    %157 = vector.broadcast %cst_34 : f32 to vector<2x128xf32>
    %158 = arith.mulf %157, %156 : vector<2x128xf32>
    %cst_35 = arith.constant 5.000000e-01 : f32
    %159 = vector.broadcast %cst_35 : f32 to vector<2x128xf32>
    %160 = arith.addf %158, %159 : vector<2x128xf32>
    %161 = arith.select %95, %156, %160 : vector<2x128xi1>, vector<2x128xf32>
    %162 = vector.extract_strided_slice %161 {offsets = [0, 0], sizes = [2, 32], strides = [1, 1]} : vector<2x128xf32> to vector<2x32xf32>
    %163 = vector.extract_strided_slice %161 {offsets = [0, 32], sizes = [2, 32], strides = [1, 1]} : vector<2x128xf32> to vector<2x32xf32>
    %164 = vector.extract_strided_slice %161 {offsets = [0, 64], sizes = [2, 32], strides = [1, 1]} : vector<2x128xf32> to vector<2x32xf32>
    %165 = vector.extract_strided_slice %161 {offsets = [0, 96], sizes = [2, 32], strides = [1, 1]} : vector<2x128xf32> to vector<2x32xf32>
    %166 = arith.mulf %163, %148 : vector<2x32xf32>
    %167 = arith.mulf %162, %164 : vector<2x32xf32>
    %168 = arith.addf %166, %167 : vector<2x32xf32>
    %169 = math.tanh %168 : vector<2x32xf32>
    %170 = arith.mulf %165, %169 : vector<2x32xf32>
    %cst_36 = arith.constant dense<0.000000e+00> : vector<2x8xf32>
    %171 = tpu.matmul %170, %12, %cst_36 {dimension_numbers = #tpu.dot_dimension_numbers<[1], [0], [0], [1], [0, 0, 1, 1], [], []>} : vector<2x32xf32>, vector<32x8xf32>, vector<2x8xf32> -> vector<2x8xf32>
    %172 = vector.broadcast %13 : vector<1x8xf32> to vector<2x8xf32>
    %173 = arith.addf %171, %172 : vector<2x8xf32>
    %c0_37 = arith.constant 0 : index
    %c0_38 = arith.constant 0 : index
    %174 = vector.load %arg2[%c0_37, %c0_38] : memref<2x8xf32, #tpu.memory_space<vmem>>, vector<2x8xf32>
    tpu.vector_store %arg2[%c0_37, %c0_38], %173 {strides = array<i32>} : memref<2x8xf32, #tpu.memory_space<vmem>>, vector<2x8xf32>,
    return
  }
}

</mosaic_0001>

<llo_original>
// kernel: deep_learning_model.1
$region0: #{deep_learning_model.1}
  #allocation0 [shape = 'u32[]', space=smem, size = 0x4, offset = 0x4, fixed_abs, tag = 'smem constant byte address 0x4 - core index']
  #allocation1 [shape = 'u32[72,128]{1,0:T(1,128)}', space=vmem, size = 0x9000, scoped, tag = 'internal scratch']
  #allocation2 [shape = 'f32[2,18]{1,0:T(2,128)}', space=vmem, size = 0x400, scoped, tag = 'scratch operand']
  %s0 = inlined_call_operand.hbm [shape: f32[2,16], index: 0, kind: input, shape index: {}]
  %s1 = inlined_call_operand.hbm [shape: f32[104,128], index: 1, kind: input, shape index: {}]
  %s2 = inlined_call_operand.hbm [shape: f32[2,8], index: 2, kind: output, shape index: {}]
  %s3 = sld [smem:[#allocation0]]
  $region26: #{deep_learning_model.1} parent=0
    _
  %s5 = ssub.s32 1, %s3
  %s6 = scalar_select 0, %s5, %s3
  $region1: #{deep_learning_model.1} parent=0
    #allocation3 [shape = 'u8[1024]{0}', space=vmem, size = 0x400, scoped, tag = 'input window, operand 0, single buffered']
    #allocation4 [shape = 's32[1]{0}', space=sflag, size = 0x4, scoped, tag = 'scoped memory for deep_learning_model.1']
    #allocation5 [shape = 's32[1]{0}', space=sflag, size = 0x4, scoped, tag = 'scoped memory for deep_learning_model.1']
    #allocation6 [shape = 'u8[53248]{0}', space=vmem, size = 0xd000, scoped, tag = 'input window, operand 1, single buffered']
    #allocation7 [shape = 's32[1]{0}', space=sflag, size = 0x4, scoped, tag = 'scoped memory for deep_learning_model.1']
    #allocation8 [shape = 'u8[1024]{0}', space=vmem, size = 0x400, scoped, tag = 'output window, operand 0, single buffered']
    %7 = vsyncpa [#allocation4], 0
    %8 = vsyncpa [#allocation7], 0
    %9 = vsyncpa [#allocation5], 0
    // Predicated region
    $region2: #{deep_learning_model.1} parent=1 // pred_check
      _
    $region3: #{deep_learning_model.1} parent=1 // pred_check_branch
      %11 = sbr.rel (0) target = $region5
    $region4: #{deep_learning_model.1} parent=1 // pred_region
      %13 = vsyncadd [#allocation4], 0
      %s15 = sshll.u32 %s0, 4
      %s16 = int_to_ptr.hbm [resolvable:$true] %s15
      %s17 = sshll.u32 [#allocation3], 4
      %s18 = int_to_ptr.vmem [resolvable:$true] %s17
      %20 = dma.hbm_to_vmem [thread:$0]  %s16, 32, %s18, [#allocation4]
    $region5: #{deep_learning_model.1} parent=1 // pred_fallthru
      _
    // Predicated region
    $region6: #{deep_learning_model.1} parent=1 // pred_check
      _
    $region7: #{deep_learning_model.1} parent=1 // pred_check_branch
      %22 = sbr.rel (0) target = $region9
    $region8: #{deep_learning_model.1} parent=1 // pred_region
      %24 = vsyncadd [#allocation7], 0
      %s25 = sshll.u32 %s1, 4
      %s26 = int_to_ptr.hbm [resolvable:$true] %s25
      %s27 = sshll.u32 [#allocation6], 4
      %s28 = int_to_ptr.vmem [resolvable:$true] %s27
      %33 = dma.hbm_to_vmem [thread:$0]  %s26, 1664, %s28, [#allocation7], 128, 128, 8
    $region9: #{deep_learning_model.1} parent=1 // pred_fallthru
      _
    // Predicated region
    $region10: #{deep_learning_model.1} parent=1 // pred_check
      _
    $region11: #{deep_learning_model.1} parent=1 // pred_check_branch
      %35 = sbr.rel (0) target = $region13
    $region12: #{deep_learning_model.1} parent=1 // pred_region
      %37 = dma.done [#allocation4], 32
    $region13: #{deep_learning_model.1} parent=1 // pred_fallthru
      _
    // Predicated region
    $region14: #{deep_learning_model.1} parent=1 // pred_check
      _
    $region15: #{deep_learning_model.1} parent=1 // pred_check_branch
      %39 = sbr.rel (0) target = $region17
    $region16: #{deep_learning_model.1} parent=1 // pred_region
      %41 = dma.done [#allocation7], 1664
    $region17: #{deep_learning_model.1} parent=1 // pred_fallthru
      _
    %vm42 = vcmask 140288
    %43 = vst.msk [vmem:[#allocation2] sm:$0x3] %vm42, 0.0
    %v44 = vld [vmem:[#allocation3] sm:$0x3]
    %46 = vrot.lane.b32.xlu0 %v44, 1
    %v47 = vpop.permute.xlu0 %46
    %vm49 = vcmask 132104
    %50 = vst.msk [vmem:[#allocation2] sm:$0x3] %vm49, %v47
    %v51 = vld [vmem:[#allocation2] sm:$0x3]
    %v52 = vld [vmem:[#allocation6] sm:$0xf]
    %v53 = vld [vmem:[#allocation6 + $0x8] sm:$0xff]
    %v54 = vld [vmem:[#allocation6 + $0x10] sm:$0xff]
    %v55 = vld [vmem:[#allocation6 + $0x18] sm:$0xff]
    %v56 = vld [vmem:[#allocation6 + $0x20] sm:$0xff]
    %v57 = vld [vmem:[#allocation6 + $0x28] sm:$0xff]
    %v58 = vld [vmem:[#allocation6 + $0x30] sm:$0xff]
    %v59 = vld [vmem:[#allocation6 + $0x38] sm:$0x1]
    %v60 = vld [vmem:[#allocation6 + $0x40] sm:$0xff]
    %v61 = vld [vmem:[#allocation6 + $0x48] sm:$0xff]
    %v62 = vld [vmem:[#allocation6 + $0x50] sm:$0xff]
    %v63 = vld [vmem:[#allocation6 + $0x58] sm:$0xff]
    %v64 = vld [vmem:[#allocation6 + $0x60] sm:$0x1]
    %s66 = vtos %v52
    %v67 = vstv %s66
    %v69 = vmul.f32 %v67, %v51
    %70 = vrot.lane.b32.xlu0 %v52, 125
    %v71 = vpop.permute.xlu0 %70
    %s72 = vtos %v71
    %v73 = vstv %s72
    %v75 = vadd.f32 %v73, %v69
    %76 = vrot.lane.b32.xlu0 %v52, 127
    %v77 = vpop.permute.xlu0 %76
    %s78 = vtos %v77
    %v79 = vstv %s78
    %v81 = vmul.f32 %v79, %v51
    %83 = vrot.lane.b32.xlu0 %v81, 127
    %v84 = vpop.permute.xlu0 %83
    %v86 = vadd.f32 %v75, %v84
    %87 = vrot.lane.b32.xlu0 %v52, 126
    %v88 = vpop.permute.xlu0 %87
    %s89 = vtos %v88
    %v90 = vstv %s89
    %v92 = vmul.f32 %v90, %v51
    %94 = vrot.lane.b32.xlu0 %v92, 126
    %v95 = vpop.permute.xlu0 %94
    %v97 = vadd.f32 %v86, %v95
    %v98 = vmax.f32 %v97, 0.0
    %v99 = vperm.slane %v59, 0
    %vm100 = vcmask 130048
    %v102 = vsel %vm100, %v98, 0
    %104 = vmatpush.msra.mxu0 0.0
    %105 = vmatpush.msra.mxu0 0.0
    %106 = vmatpush.msra.mxu0 0.0
    %107 = vmatpush.msra.mxu0 0.0
    %108 = vmatpush.msra.mxu0 0.0
    %109 = vmatpush.msra.mxu0 0.0
    %110 = vmatpush.msra.mxu0 0.0
    %111 = vmatpush.msra.mxu0 0.0
    %112 = vmatpush.msra.mxu0 0.0
    %113 = vmatpush.msra.mxu0 0.0
    %114 = vmatpush.msra.mxu0 0.0
    %115 = vmatpush.msra.mxu0 0.0
    %116 = vmatpush.msra.mxu0 0.0
    %117 = vmatpush.msra.mxu0 0.0
    %118 = vmatpush.msra.mxu0 %v54
    %119 = vmatpush.msra.mxu0 %v53
    %120 = vmatmul.f32.gmra.mxu0 %v102
    %v121 = vpop.f32.mrf.mxu0
    %v122 = vadd.f32 %v99, %v121
    %123 = vdwg.mxu0
    %v124 = vrot.slane %v52, 1
    %s125 = vtos %v124
    %v126 = vstv %s125
    %v128 = vmul.f32 %v126, %v51
    %129 = vrot.lane.b32.xlu0 %v124, 125
    %v130 = vpop.permute.xlu0 %129
    %s131 = vtos %v130
    %v132 = vstv %s131
    %v134 = vadd.f32 %v132, %v128
    %135 = vrot.lane.b32.xlu0 %v124, 127
    %v136 = vpop.permute.xlu0 %135
    %s137 = vtos %v136
    %v138 = vstv %s137
    %v140 = vmul.f32 %v138, %v51
    %142 = vrot.lane.b32.xlu0 %v140, 127
    %v143 = vpop.permute.xlu0 %142
    %v145 = vadd.f32 %v134, %v143
    %146 = vrot.lane.b32.xlu0 %v124, 126
    %v147 = vpop.permute.xlu0 %146
    %s148 = vtos %v147
    %v149 = vstv %s148
    %v151 = vmul.f32 %v149, %v51
    %153 = vrot.lane.b32.xlu0 %v151, 126
    %v154 = vpop.permute.xlu0 %153
    %v156 = vadd.f32 %v145, %v154
    %v157 = vmax.f32 %v156, 0.0
    %v159 = vsel %vm100, %v157, 0
    %161 = vmatpush.msra.mxu0 0.0
    %162 = vmatpush.msra.mxu0 0.0
    %163 = vmatpush.msra.mxu0 0.0
    %164 = vmatpush.msra.mxu0 0.0
    %165 = vmatpush.msra.mxu0 0.0
    %166 = vmatpush.msra.mxu0 0.0
    %167 = vmatpush.msra.mxu0 0.0
    %168 = vmatpush.msra.mxu0 0.0
    %169 = vmatpush.msra.mxu0 0.0
    %170 = vmatpush.msra.mxu0 0.0
    %171 = vmatpush.msra.mxu0 0.0
    %172 = vmatpush.msra.mxu0 0.0
    %173 = vmatpush.msra.mxu0 0.0
    %174 = vmatpush.msra.mxu0 0.0
    %175 = vmatpush.msra.mxu0 %v54
    %176 = vmatpush.msra.mxu0 %v53
    %177 = vmatmul.f32.gmra.mxu0 %v159
    %v178 = vpop.f32.mrf.mxu0
    %v179 = vadd.f32 %v99, %v178
    %180 = vdwg.mxu0
    %v181 = vrot.slane %v52, 2
    %s182 = vtos %v181
    %v183 = vstv %s182
    %v185 = vmul.f32 %v183, %v51
    %186 = vrot.lane.b32.xlu0 %v181, 125
    %v187 = vpop.permute.xlu0 %186
    %s188 = vtos %v187
    %v189 = vstv %s188
    %v191 = vadd.f32 %v189, %v185
    %192 = vrot.lane.b32.xlu0 %v181, 127
    %v193 = vpop.permute.xlu0 %192
    %s194 = vtos %v193
    %v195 = vstv %s194
    %v197 = vmul.f32 %v195, %v51
    %199 = vrot.lane.b32.xlu0 %v197, 127
    %v200 = vpop.permute.xlu0 %199
    %v202 = vadd.f32 %v191, %v200
    %203 = vrot.lane.b32.xlu0 %v181, 126
    %v204 = vpop.permute.xlu0 %203
    %s205 = vtos %v204
    %v206 = vstv %s205
    %v208 = vmul.f32 %v206, %v51
    %210 = vrot.lane.b32.xlu0 %v208, 126
    %v211 = vpop.permute.xlu0 %210
    %v213 = vadd.f32 %v202, %v211
    %v214 = vmax.f32 %v213, 0.0
    %v216 = vsel %vm100, %v214, 0
    %218 = vmatpush.msra.mxu0 0.0
    %219 = vmatpush.msra.mxu0 0.0
    %220 = vmatpush.msra.mxu0 0.0
    %221 = vmatpush.msra.mxu0 0.0
    %222 = vmatpush.msra.mxu0 0.0
    %223 = vmatpush.msra.mxu0 0.0
    %224 = vmatpush.msra.mxu0 0.0
    %225 = vmatpush.msra.mxu0 0.0
    %226 = vmatpush.msra.mxu0 0.0
    %227 = vmatpush.msra.mxu0 0.0
    %228 = vmatpush.msra.mxu0 0.0
    %229 = vmatpush.msra.mxu0 0.0
    %230 = vmatpush.msra.mxu0 0.0
    %231 = vmatpush.msra.mxu0 0.0
    %232 = vmatpush.msra.mxu0 %v54
    %233 = vmatpush.msra.mxu0 %v53
    %234 = vmatmul.f32.gmra.mxu0 %v216
    %v235 = vpop.f32.mrf.mxu0
    %v236 = vadd.f32 %v99, %v235
    %237 = vdwg.mxu0
    %v238 = vrot.slane %v52, 3
    %s239 = vtos %v238
    %v240 = vstv %s239
    %v242 = vmul.f32 %v240, %v51
    %243 = vrot.lane.b32.xlu0 %v238, 125
    %v244 = vpop.permute.xlu0 %243
    %s245 = vtos %v244
    %v246 = vstv %s245
    %v248 = vadd.f32 %v246, %v242
    %249 = vrot.lane.b32.xlu0 %v238, 127
    %v250 = vpop.permute.xlu0 %249
    %s251 = vtos %v250
    %v252 = vstv %s251
    %v254 = vmul.f32 %v252, %v51
    %256 = vrot.lane.b32.xlu0 %v254, 127
    %v257 = vpop.permute.xlu0 %256
    %v259 = vadd.f32 %v248, %v257
    %260 = vrot.lane.b32.xlu0 %v238, 126
    %v261 = vpop.permute.xlu0 %260
    %s262 = vtos %v261
    %v263 = vstv %s262
    %v265 = vmul.f32 %v263, %v51
    %267 = vrot.lane.b32.xlu0 %v265, 126
    %v268 = vpop.permute.xlu0 %267
    %v270 = vadd.f32 %v259, %v268
    %v271 = vmax.f32 %v270, 0.0
    %v273 = vsel %vm100, %v271, 0
    %275 = vmatpush.msra.mxu0 0.0
    %276 = vmatpush.msra.mxu0 0.0
    %277 = vmatpush.msra.mxu0 0.0
    %278 = vmatpush.msra.mxu0 0.0
    %279 = vmatpush.msra.mxu0 0.0
    %280 = vmatpush.msra.mxu0 0.0
    %281 = vmatpush.msra.mxu0 0.0
    %282 = vmatpush.msra.mxu0 0.0
    %283 = vmatpush.msra.mxu0 0.0
    %284 = vmatpush.msra.mxu0 0.0
    %285 = vmatpush.msra.mxu0 0.0
    %286 = vmatpush.msra.mxu0 0.0
    %287 = vmatpush.msra.mxu0 0.0
    %288 = vmatpush.msra.mxu0 0.0
    %289 = vmatpush.msra.mxu0 %v54
    %290 = vmatpush.msra.mxu0 %v53
    %291 = vmatmul.f32.gmra.mxu0 %v273
    %v292 = vpop.f32.mrf.mxu0
    %v293 = vadd.f32 %v99, %v292
    %294 = vdwg.mxu0
    %v295 = vlaneseq
    %v296 = vand.u32 %v295, 127
    %vm297 = vcmp.ge.s32.totalorder %v296, 64
    %vm298 = vcmp.lt.s32.totalorder %v296, 96
    %vm299 = vmand %vm297, %vm298
    %v300 = vmul.f32 %v122, 0.5
    %v301 = vsel %vm299, %v122, %v300
    %v302 = vtanh.pop %v301
    %v303 = vmul.f32 %v302, 0.5
    %v304 = vadd.f32 %v303, 0.5
    %v305 = vsel %vm299, %v302, %v304
    %307 = vrot.lane.b32.xlu0 %v305, 64
    %v308 = vpop.permute.xlu0 %307
    %v310 = vmul.f32 %v305, %v308
    %v311 = vtanh.pop %v310
    %313 = vrot.lane.b32.xlu0 %v311, 96
    %v314 = vpop.permute.xlu0 %313
    %v316 = vmul.f32 %v305, %v314
    %318 = vrot.lane.b32.xlu0 %v316, 32
    %v319 = vpop.permute.xlu0 %318
    %vm320 = vcmask 261120
    %v321 = vsel %vm320, %v319, 0
    %323 = vmatpush.msra.mxu0 0.0
    %324 = vmatpush.msra.mxu0 0.0
    %325 = vmatpush.msra.mxu0 0.0
    %326 = vmatpush.msra.mxu0 0.0
    %327 = vmatpush.msra.mxu0 0.0
    %328 = vmatpush.msra.mxu0 0.0
    %329 = vmatpush.msra.mxu0 0.0
    %330 = vmatpush.msra.mxu0 0.0
    %331 = vmatpush.msra.mxu0 0.0
    %332 = vmatpush.msra.mxu0 0.0
    %333 = vmatpush.msra.mxu0 0.0
    %334 = vmatpush.msra.mxu0 0.0
    %335 = vmatpush.msra.mxu0 %v58
    %336 = vmatpush.msra.mxu0 %v57
    %337 = vmatpush.msra.mxu0 %v56
    %338 = vmatpush.msra.mxu0 %v55
    %339 = vmatmul.f32.gmra.mxu0 %v321
    %v340 = vpop.f32.mrf.mxu0
    %v341 = vadd.f32 0.0, %v340
    %342 = vdwg.mxu0
    %v343 = vadd.f32 %v179, %v341
    %v344 = vmul.f32 %v343, 0.5
    %v345 = vsel %vm299, %v343, %v344
    %v346 = vtanh.pop %v345
    %v347 = vmul.f32 %v346, 0.5
    %v348 = vadd.f32 %v347, 0.5
    %v349 = vsel %vm299, %v346, %v348
    %351 = vrot.lane.b32.xlu0 %v310, 32
    %v352 = vpop.permute.xlu0 %351
    %v354 = vmul.f32 %v349, %v352
    %356 = vrot.lane.b32.xlu0 %v349, 64
    %v357 = vpop.permute.xlu0 %356
    %v359 = vmul.f32 %v349, %v357
    %361 = vrot.lane.b32.xlu0 %v359, 32
    %v362 = vpop.permute.xlu0 %361
    %v364 = vadd.f32 %v354, %v362
    %v365 = vtanh.pop %v364
    %367 = vrot.lane.b32.xlu0 %v365, 64
    %v368 = vpop.permute.xlu0 %367
    %v370 = vmul.f32 %v349, %v368
    %372 = vrot.lane.b32.xlu0 %v370, 32
    %v373 = vpop.permute.xlu0 %372
    %v374 = vsel %vm320, %v373, 0
    %376 = vmatpush.msra.mxu0 0.0
    %377 = vmatpush.msra.mxu0 0.0
    %378 = vmatpush.msra.mxu0 0.0
    %379 = vmatpush.msra.mxu0 0.0
    %380 = vmatpush.msra.mxu0 0.0
    %381 = vmatpush.msra.mxu0 0.0
    %382 = vmatpush.msra.mxu0 0.0
    %383 = vmatpush.msra.mxu0 0.0
    %384 = vmatpush.msra.mxu0 0.0
    %385 = vmatpush.msra.mxu0 0.0
    %386 = vmatpush.msra.mxu0 0.0
    %387 = vmatpush.msra.mxu0 0.0
    %388 = vmatpush.msra.mxu0 %v58
    %389 = vmatpush.msra.mxu0 %v57
    %390 = vmatpush.msra.mxu0 %v56
    %391 = vmatpush.msra.mxu0 %v55
    %392 = vmatmul.f32.gmra.mxu0 %v374
    %v393 = vpop.f32.mrf.mxu0
    %v394 = vadd.f32 0.0, %v393
    %395 = vdwg.mxu0
    %v396 = vadd.f32 %v236, %v394
    %v397 = vmul.f32 %v396, 0.5
    %v398 = vsel %vm299, %v396, %v397
    %v399 = vtanh.pop %v398
    %v400 = vmul.f32 %v399, 0.5
    %v401 = vadd.f32 %v400, 0.5
    %v402 = vsel %vm299, %v399, %v401
    %v403 = vmul.f32 %v402, %v364
    %405 = vrot.lane.b32.xlu0 %v402, 64
    %v406 = vpop.permute.xlu0 %405
    %v408 = vmul.f32 %v402, %v406
    %410 = vrot.lane.b32.xlu0 %v408, 32
    %v411 = vpop.permute.xlu0 %410
    %v413 = vadd.f32 %v403, %v411
    %v414 = vtanh.pop %v413
    %416 = vrot.lane.b32.xlu0 %v414, 64
    %v417 = vpop.permute.xlu0 %416
    %v419 = vmul.f32 %v402, %v417
    %421 = vrot.lane.b32.xlu0 %v419, 32
    %v422 = vpop.permute.xlu0 %421
    %v423 = vsel %vm320, %v422, 0
    %425 = vmatpush.msra.mxu0 0.0
    %426 = vmatpush.msra.mxu0 0.0
    %427 = vmatpush.msra.mxu0 0.0
    %428 = vmatpush.msra.mxu0 0.0
    %429 = vmatpush.msra.mxu0 0.0
    %430 = vmatpush.msra.mxu0 0.0
    %431 = vmatpush.msra.mxu0 0.0
    %432 = vmatpush.msra.mxu0 0.0
    %433 = vmatpush.msra.mxu0 0.0
    %434 = vmatpush.msra.mxu0 0.0
    %435 = vmatpush.msra.mxu0 0.0
    %436 = vmatpush.msra.mxu0 0.0
    %437 = vmatpush.msra.mxu0 %v58
    %438 = vmatpush.msra.mxu0 %v57
    %439 = vmatpush.msra.mxu0 %v56
    %440 = vmatpush.msra.mxu0 %v55
    %441 = vmatmul.f32.gmra.mxu0 %v423
    %v442 = vpop.f32.mrf.mxu0
    %v443 = vadd.f32 0.0, %v442
    %444 = vdwg.mxu0
    %v445 = vadd.f32 %v293, %v443
    %v446 = vmul.f32 %v445, 0.5
    %v447 = vsel %vm299, %v445, %v446
    %v448 = vtanh.pop %v447
    %v449 = vmul.f32 %v448, 0.5
    %v450 = vadd.f32 %v449, 0.5
    %v451 = vsel %vm299, %v448, %v450
    %v452 = vmul.f32 %v451, %v413
    %454 = vrot.lane.b32.xlu0 %v451, 64
    %v455 = vpop.permute.xlu0 %454
    %v457 = vmul.f32 %v451, %v455
    %459 = vrot.lane.b32.xlu0 %v457, 32
    %v460 = vpop.permute.xlu0 %459
    %v462 = vadd.f32 %v452, %v460
    %v463 = vtanh.pop %v462
    %465 = vrot.lane.b32.xlu0 %v463, 64
    %v466 = vpop.permute.xlu0 %465
    %v468 = vmul.f32 %v451, %v466
    %v469 = vperm.slane %v64, 0
    %471 = vrot.lane.b32.xlu0 %v468, 32
    %v472 = vpop.permute.xlu0 %471
    %v473 = vsel %vm320, %v472, 0
    %475 = vmatpush.msra.mxu0 0.0
    %476 = vmatpush.msra.mxu0 0.0
    %477 = vmatpush.msra.mxu0 0.0
    %478 = vmatpush.msra.mxu0 0.0
    %479 = vmatpush.msra.mxu0 0.0
    %480 = vmatpush.msra.mxu0 0.0
    %481 = vmatpush.msra.mxu0 0.0
    %482 = vmatpush.msra.mxu0 0.0
    %483 = vmatpush.msra.mxu0 0.0
    %484 = vmatpush.msra.mxu0 0.0
    %485 = vmatpush.msra.mxu0 0.0
    %486 = vmatpush.msra.mxu0 0.0
    %487 = vmatpush.msra.mxu0 %v63
    %488 = vmatpush.msra.mxu0 %v62
    %489 = vmatpush.msra.mxu0 %v61
    %490 = vmatpush.msra.mxu0 %v60
    %491 = vmatmul.f32.gmra.mxu0 %v473
    %v492 = vpop.f32.mrf.mxu0
    %v493 = vadd.f32 %v469, %v492
    %494 = vdwg.mxu0
    %vm495 = vcmask 58368
    %496 = vst.msk [vmem:[#allocation8] sm:$0x3] %vm495, %v493
    // Predicated region
    $region18: #{deep_learning_model.1} parent=1 // pred_check
      _
    $region19: #{deep_learning_model.1} parent=1 // pred_check_branch
      %498 = sbr.rel (0) target = $region21
    $region20: #{deep_learning_model.1} parent=1 // pred_region
      %500 = vsyncadd [#allocation5], 0
      %s502 = sshll.u32 [#allocation8], 4
      %s503 = int_to_ptr.vmem [resolvable:$true] %s502
      %s504 = sshll.u32 %s2, 4
      %s505 = int_to_ptr.hbm [resolvable:$true] %s504
      %507 = dma.vmem_to_hbm [thread:$0]  %s503, 32, %s505, [#allocation5]
    $region21: #{deep_learning_model.1} parent=1 // pred_fallthru
      _
    // Predicated region
    $region22: #{deep_learning_model.1} parent=1 // pred_check
      _
    $region23: #{deep_learning_model.1} parent=1 // pred_check_branch
      %509 = sbr.rel (0) target = $region25
    $region24: #{deep_learning_model.1} parent=1 // pred_region
      %511 = dma.done [#allocation5], 32
    $region25: #{deep_learning_model.1} parent=1 // pred_fallthru
      _
    %512 = vsyncpa [#allocation4], 1
    %513 = vsyncpa [#allocation7], 1
    %514 = vsyncpa [#allocation5], 1

</llo_original>
